<compile_context>
chip_gen: v6e
topology: v6e:2x2x1
jax: 0.10.0
libtpu: 0.0.40
codegen_flags: <defaults>
</compile_context>

<pallas_src>
import functools

import jax
import jax.numpy as jnp
from jax.experimental import pallas as pl
from jax.experimental.pallas import tpu as pltpu

_H1 = 64
_H2 = 128


def _round_up(n, m):
    return ((n + m - 1) // m) * m


def _cdiv(a, b):
    return -(-a // b)


def dqn_kernel(x_ref, w1_ref, b1_ref, w2_ref, b2_ref, w3_ref, b3_ref, o_ref,
               *, matmul_dtype):
    # Layer 1: Linear(input_size -> 64) + ReLU  (MXU in matmul_dtype, f32 accum)
    x = x_ref[...].astype(matmul_dtype)
    h1 = jnp.dot(x, w1_ref[...], preferred_element_type=jnp.float32)
    h1 = jnp.maximum(h1 + b1_ref[...], 0.0)
    # Layer 2: Linear(64 -> 128) + ReLU
    # TODO(synk): padding K=16/64 to fill the MXU is intentionally skipped --
    # this kernel is HBM-bound at these layer sizes, not MXU-bound.
    h2 = jnp.dot(h1.astype(matmul_dtype), w2_ref[...],
                 preferred_element_type=jnp.float32)
    h2 = jnp.maximum(h2 + b2_ref[...], 0.0)
    # Layer 3: Linear(128 -> out_size), no activation; narrow (unpadded) store.
    out = jnp.dot(h2.astype(matmul_dtype), w3_ref[...],
                  preferred_element_type=jnp.float32)
    o_ref[...] = (out + b3_ref[...]).astype(o_ref.dtype)


def _choose_tiling(B, tile_b):
    """Pick (tb, b_pad, num_tiles) with minimal padding and >=2 tiles for big B."""
    tile_b = max(8, _round_up(tile_b, 8))
    num_tiles = max(1, _cdiv(B, tile_b))
    # Give the v7x megacore a second grid step when the batch is large enough
    # for the split to be worthwhile (harmless on single-TC chips).
    if num_tiles == 1 and B >= 2048:
        num_tiles = 2
    tb = _round_up(_cdiv(B, num_tiles), 8)
    b_pad = tb * num_tiles
    return tb, b_pad, num_tiles


def dqn_forward(x, params, *, tile_b=4096, matmul_dtype=jnp.bfloat16):
    w1, b1, w2, b2, w3, b3 = params
    B, in_size = x.shape
    out_size = w3.shape[1]

    # Pre-cast weights to the MXU operand dtype once (biases stay f32 for the
    # f32-accumulator add).  Weights are tiny, so this is negligible traffic.
    w1c = w1.astype(matmul_dtype)
    w2c = w2.astype(matmul_dtype)
    w3c = w3.astype(matmul_dtype)

    tb, b_pad, num_tiles = _choose_tiling(B, tile_b)
    x_p = jnp.pad(x, ((0, b_pad - B), (0, 0))) if b_pad != B else x

    weight_spec = lambda shape: pl.BlockSpec(shape, lambda i: (0, 0))

    itemsize_x = x.dtype.itemsize
    itemsize_mm = jnp.dtype(matmul_dtype).itemsize
    weight_bytes = sum(int(a.size) * a.dtype.itemsize
                       for a in (w1c, b1, w2c, b2, w3c, b3))
    # Per-grid-step VMEM budget: double-buffered x / out tiles + f32
    # intermediates + matmul_dtype casts + resident weights.
    per_step_bytes = (
        2 * tb * in_size * itemsize_x
        + 2 * tb * out_size * itemsize_x
        + tb * in_size * itemsize_mm
        + tb * (_H1 + _H2) * (4 + itemsize_mm)
        + weight_bytes
    )
    vmem_limit = int(min(64 << 20, max(32 << 20, 2 * per_step_bytes)))

    flops = 2 * b_pad * (in_size * _H1 + _H1 * _H2 + _H2 * out_size)
    bytes_accessed = (
        x_p.size * itemsize_x
        + b_pad * out_size * itemsize_x
        + weight_bytes
    )

    out = pl.pallas_call(
        functools.partial(dqn_kernel, matmul_dtype=matmul_dtype),
        out_shape=jax.ShapeDtypeStruct((b_pad, out_size), x.dtype),
        grid=(num_tiles,),
        in_specs=[
            pl.BlockSpec((tb, in_size), lambda i: (i, 0)),   # x: streamed batch tiles
            weight_spec((in_size, _H1)),                     # w1 (VMEM-resident)
            weight_spec((1, _H1)),                           # b1
            weight_spec((_H1, _H2)),                         # w2
            weight_spec((1, _H2)),                           # b2
            weight_spec((_H2, out_size)),                    # w3
            weight_spec((1, out_size)),                      # b3
        ],
        out_specs=pl.BlockSpec((tb, out_size), lambda i: (i, 0)),
        compiler_params=pltpu.CompilerParams(
            dimension_semantics=("parallel",),
            vmem_limit_bytes=vmem_limit),
        cost_estimate=pl.CostEstimate(
            flops=int(flops), transcendentals=0,
            bytes_accessed=int(bytes_accessed)),
    )(x_p, w1c, b1, w2c, b2, w3c, b3)

    return out if b_pad == B else out[:B]


def init_dqn_params(key, input_size, output_size, dtype=jnp.float32):
    """PyTorch-style default Linear init U(-1/sqrt(fan_in), 1/sqrt(fan_in))."""
    sizes = [(input_size, _H1), (_H1, _H2), (_H2, output_size)]
    params = []
    for (fan_in, fan_out) in sizes:
        key, kw, kb = jax.random.split(key, 3)
        bound = 1.0 / jnp.sqrt(jnp.asarray(fan_in, dtype))
        w = jax.random.uniform(kw, (fan_in, fan_out), dtype, -bound, bound)
        b = jax.random.uniform(kb, (1, fan_out), dtype, -bound, bound)
        params += [w, b]
    return tuple(params)


def dqn_reference(x, params):
    w1, b1, w2, b2, w3, b3 = params
    h1 = jnp.maximum(x @ w1 + b1, 0.0)
    h2 = jnp.maximum(h1 @ w2 + b2, 0.0)
    return h2 @ w3 + b3


if __name__ == "__main__":
    input_size, output_size, batch = 16, 4, 2

    key = jax.random.PRNGKey(0)
    key, kx = jax.random.split(key)
    x = jax.random.normal(kx, (batch, input_size), jnp.float32)
    params = init_dqn_params(key, input_size, output_size)

    ref = dqn_reference(x, params)

    # Exact-parity path (f32 MXU operands).
    out_f32 = dqn_forward(x, params, matmul_dtype=jnp.float32)
    jax.block_until_ready(out_f32)
    assert out_f32.shape == (batch, output_size)
    assert jnp.allclose(out_f32, ref, atol=1e-5, rtol=1e-5), \
        "Pallas f32 output mismatch vs reference"

    # Fast path (bf16 MXU operands, f32 accumulation) -> looser tolerance.
    out_bf16 = dqn_forward(x, params, matmul_dtype=jnp.bfloat16)
    jax.block_until_ready(out_bf16)
    assert out_bf16.shape == (batch, output_size)
    assert jnp.allclose(out_bf16, ref, atol=2e-2, rtol=2e-2), \
        "Pallas bf16 output mismatch vs reference"

    # Multi-tile + ragged-batch path (exercises the grid and tail padding).
    key, kx2 = jax.random.split(key)
    x_big = jax.random.normal(kx2, (300, input_size), jnp.float32)
    out_big = dqn_forward(x_big, params, tile_b=128, matmul_dtype=jnp.float32)
    jax.block_until_ready(out_big)
    assert out_big.shape == (300, output_size)
    assert jnp.allclose(out_big, dqn_reference(x_big, params),
                        atol=1e-5, rtol=1e-5), \
        "Pallas multi-tile output mismatch vs reference"

    print("KERNEL_OK")
</pallas_src>

<mosaic_0001>
module attributes {stable_mosaic.version = 11 : i64} {
  func.func @dqn_kernel(%arg0: i32, %arg1: memref<8x16xf32, #tpu.memory_space<vmem>>, %arg2: memref<16x64xf32, #tpu.memory_space<vmem>>, %arg3: memref<1x64xf32, #tpu.memory_space<vmem>>, %arg4: memref<64x128xf32, #tpu.memory_space<vmem>>, %arg5: memref<1x128xf32, #tpu.memory_space<vmem>>, %arg6: memref<128x4xf32, #tpu.memory_space<vmem>>, %arg7: memref<1x4xf32, #tpu.memory_space<vmem>>, %arg8: memref<8x4xf32, #tpu.memory_space<vmem>>) attributes {dimension_semantics = [#tpu.dimension_semantics<parallel>], iteration_bounds = array<i64: 1>, scalar_prefetch = 0 : i64, scratch_operands = 0 : i64, tpu.core_type = #tpu.core_type<tc>, window_params = [{transform_indices = @transform_0, window_bounds = array<i64: 8, 16>}, {pipeline_mode = #tpu.pipeline_mode<synchronous>, transform_indices = @transform_1, window_bounds = array<i64: 16, 64>}, {pipeline_mode = #tpu.pipeline_mode<synchronous>, transform_indices = @transform_2, window_bounds = array<i64: 1, 64>}, {pipeline_mode = #tpu.pipeline_mode<synchronous>, transform_indices = @transform_3, window_bounds = array<i64: 64, 128>}, {pipeline_mode = #tpu.pipeline_mode<synchronous>, transform_indices = @transform_4, window_bounds = array<i64: 1, 128>}, {pipeline_mode = #tpu.pipeline_mode<synchronous>, transform_indices = @transform_5, window_bounds = array<i64: 128, 4>}, {pipeline_mode = #tpu.pipeline_mode<synchronous>, transform_indices = @transform_6, window_bounds = array<i64: 1, 4>}, {transform_indices = @transform_7, window_bounds = array<i64: 8, 4>}]} {
    %c0 = arith.constant 0 : index
    %c0_0 = arith.constant 0 : index
    %0 = vector.load %arg1[%c0, %c0_0] : memref<8x16xf32, #tpu.memory_space<vmem>>, vector<8x16xf32>
    %c0_1 = arith.constant 0 : index
    %c0_2 = arith.constant 0 : index
    %1 = vector.load %arg2[%c0_1, %c0_2] : memref<16x64xf32, #tpu.memory_space<vmem>>, vector<16x64xf32>
    %cst = arith.constant dense<0.000000e+00> : vector<8x64xf32>
    %2 = tpu.matmul %0, %1, %cst {dimension_numbers = #tpu.dot_dimension_numbers<[1], [0], [0], [1], [0, 0, 1, 1], [], []>} : vector<8x16xf32>, vector<16x64xf32>, vector<8x64xf32> -> vector<8x64xf32>
    %c0_3 = arith.constant 0 : index
    %c0_4 = arith.constant 0 : index
    %3 = vector.load %arg3[%c0_3, %c0_4] : memref<1x64xf32, #tpu.memory_space<vmem>>, vector<1x64xf32>
    %4 = vector.broadcast %3 : vector<1x64xf32> to vector<8x64xf32>
    %5 = arith.addf %2, %4 : vector<8x64xf32>
    %cst_5 = arith.constant 0.000000e+00 : f32
    %6 = vector.broadcast %cst_5 : f32 to vector<8x64xf32>
    %7 = arith.maximumf %5, %6 : vector<8x64xf32>
    %c0_6 = arith.constant 0 : index
    %c0_7 = arith.constant 0 : index
    %8 = vector.load %arg4[%c0_6, %c0_7] : memref<64x128xf32, #tpu.memory_space<vmem>>, vector<64x128xf32>
    %cst_8 = arith.constant dense<0.000000e+00> : vector<8x128xf32>
    %9 = tpu.matmul %7, %8, %cst_8 {dimension_numbers = #tpu.dot_dimension_numbers<[1], [0], [0], [1], [0, 0, 1, 1], [], []>} : vector<8x64xf32>, vector<64x128xf32>, vector<8x128xf32> -> vector<8x128xf32>
    %c0_9 = arith.constant 0 : index
    %c0_10 = arith.constant 0 : index
    %10 = vector.load %arg5[%c0_9, %c0_10] : memref<1x128xf32, #tpu.memory_space<vmem>>, vector<1x128xf32>
    %11 = vector.broadcast %10 : vector<1x128xf32> to vector<8x128xf32>
    %12 = arith.addf %9, %11 : vector<8x128xf32>
    %cst_11 = arith.constant 0.000000e+00 : f32
    %13 = vector.broadcast %cst_11 : f32 to vector<8x128xf32>
    %14 = arith.maximumf %12, %13 : vector<8x128xf32>
    %c0_12 = arith.constant 0 : index
    %c0_13 = arith.constant 0 : index
    %15 = vector.load %arg6[%c0_12, %c0_13] : memref<128x4xf32, #tpu.memory_space<vmem>>, vector<128x4xf32>
    %cst_14 = arith.constant dense<0.000000e+00> : vector<8x4xf32>
    %16 = tpu.matmul %14, %15, %cst_14 {dimension_numbers = #tpu.dot_dimension_numbers<[1], [0], [0], [1], [0, 0, 1, 1], [], []>} : vector<8x128xf32>, vector<128x4xf32>, vector<8x4xf32> -> vector<8x4xf32>
    %c0_15 = arith.constant 0 : index
    %c0_16 = arith.constant 0 : index
    %17 = vector.load %arg7[%c0_15, %c0_16] : memref<1x4xf32, #tpu.memory_space<vmem>>, vector<1x4xf32>
    %18 = vector.broadcast %17 : vector<1x4xf32> to vector<8x4xf32>
    %19 = arith.addf %16, %18 : vector<8x4xf32>
    %c0_17 = arith.constant 0 : index
    %c0_18 = arith.constant 0 : index
    %20 = vector.load %arg8[%c0_17, %c0_18] : memref<8x4xf32, #tpu.memory_space<vmem>>, vector<8x4xf32>
    tpu.vector_store %arg8[%c0_17, %c0_18], %19 {strides = array<i32>} : memref<8x4xf32, #tpu.memory_space<vmem>>, vector<8x4xf32>,
    return
  }
  func.func @transform_0(%arg0: i32) -> (i32, i32) {
    %c0_i32 = arith.constant 0 : i32
    %c0_i32_0 = arith.constant 0 : i32
    return %arg0, %c0_i32 : i32, i32
  }
  func.func @transform_1(%arg0: i32) -> (i32, i32) {
    %c0_i32 = arith.constant 0 : i32
    %c0_i32_0 = arith.constant 0 : i32
    %c0_i32_1 = arith.constant 0 : i32
    return %c0_i32, %c0_i32_0 : i32, i32
  }
  func.func @transform_2(%arg0: i32) -> (i32, i32) {
    %c0_i32 = arith.constant 0 : i32
    %c0_i32_0 = arith.constant 0 : i32
    %c0_i32_1 = arith.constant 0 : i32
    return %c0_i32, %c0_i32_0 : i32, i32
  }
  func.func @transform_3(%arg0: i32) -> (i32, i32) {
    %c0_i32 = arith.constant 0 : i32
    %c0_i32_0 = arith.constant 0 : i32
    %c0_i32_1 = arith.constant 0 : i32
    return %c0_i32, %c0_i32_0 : i32, i32
  }
  func.func @transform_4(%arg0: i32) -> (i32, i32) {
    %c0_i32 = arith.constant 0 : i32
    %c0_i32_0 = arith.constant 0 : i32
    %c0_i32_1 = arith.constant 0 : i32
    return %c0_i32, %c0_i32_0 : i32, i32
  }
  func.func @transform_5(%arg0: i32) -> (i32, i32) {
    %c0_i32 = arith.constant 0 : i32
    %c0_i32_0 = arith.constant 0 : i32
    %c0_i32_1 = arith.constant 0 : i32
    return %c0_i32, %c0_i32_0 : i32, i32
  }
  func.func @transform_6(%arg0: i32) -> (i32, i32) {
    %c0_i32 = arith.constant 0 : i32
    %c0_i32_0 = arith.constant 0 : i32
    %c0_i32_1 = arith.constant 0 : i32
    return %c0_i32, %c0_i32_0 : i32, i32
  }
  func.func @transform_7(%arg0: i32) -> (i32, i32) {
    %c0_i32 = arith.constant 0 : i32
    %c0_i32_0 = arith.constant 0 : i32
    return %arg0, %c0_i32 : i32, i32
  }
}

</mosaic_0001>

<llo_original>
// kernel: tpu_custom_call.1
$region0: #{tpu_custom_call.1}
  #allocation0 [shape = 'u32[]', space=smem, size = 0x4, offset = 0x4, fixed_abs, tag = 'smem constant byte address 0x4 - core index']
  #allocation1 [shape = 'u32[144,128]{1,0:T(1,128)}', space=vmem, size = 0x12000, scoped, tag = 'internal scratch']
  %s0 = inlined_call_operand.vmem [shape: f32[8,16], index: 0, kind: input, shape index: {}]
  %s1 = inlined_call_operand.vmem [shape: f32[16,64], index: 1, kind: input, shape index: {}]
  %s2 = inlined_call_operand.vmem [shape: f32[1,64], index: 2, kind: input, shape index: {}]
  %s3 = inlined_call_operand.vmem [shape: f32[64,128], index: 3, kind: input, shape index: {}]
  %s4 = inlined_call_operand.vmem [shape: f32[1,128], index: 4, kind: input, shape index: {}]
  %s5 = inlined_call_operand.vmem [shape: f32[128,4], index: 5, kind: input, shape index: {}]
  %s6 = inlined_call_operand.vmem [shape: f32[1,4], index: 6, kind: input, shape index: {}]
  %s7 = inlined_call_operand.vmem [shape: f32[8,4], index: 7, kind: output, shape index: {}]
  %s8 = sld [smem:[#allocation0]]
  $region38: #{tpu_custom_call.1} parent=0
    _
  %s10 = ssub.s32 1, %s8
  %s11 = scalar_select 0, %s10, %s8
  // Predicated region
  $region2: #{tpu_custom_call.1} parent=0 // pred_check
    _
  $region3: #{tpu_custom_call.1} parent=0 // pred_check_branch
    %13 = sbr.rel (0) target = $region5
  $region4: #{tpu_custom_call.1} parent=0 // pred_region
    _
  $region5: #{tpu_custom_call.1} parent=0 // pred_fallthru
    _
  // Predicated region
  $region6: #{tpu_custom_call.1} parent=0 // pred_check
    _
  $region7: #{tpu_custom_call.1} parent=0 // pred_check_branch
    %15 = sbr.rel (0) target = $region9
  $region8: #{tpu_custom_call.1} parent=0 // pred_region
    _
  $region9: #{tpu_custom_call.1} parent=0 // pred_fallthru
    _
  // Predicated region
  $region10: #{tpu_custom_call.1} parent=0 // pred_check
    _
  $region11: #{tpu_custom_call.1} parent=0 // pred_check_branch
    %17 = sbr.rel (0) target = $region13
  $region12: #{tpu_custom_call.1} parent=0 // pred_region
    _
  $region13: #{tpu_custom_call.1} parent=0 // pred_fallthru
    _
  // Predicated region
  $region14: #{tpu_custom_call.1} parent=0 // pred_check
    _
  $region15: #{tpu_custom_call.1} parent=0 // pred_check_branch
    %19 = sbr.rel (0) target = $region17
  $region16: #{tpu_custom_call.1} parent=0 // pred_region
    _
  $region17: #{tpu_custom_call.1} parent=0 // pred_fallthru
    _
  // Predicated region
  $region18: #{tpu_custom_call.1} parent=0 // pred_check
    _
  $region19: #{tpu_custom_call.1} parent=0 // pred_check_branch
    %21 = sbr.rel (0) target = $region21
  $region20: #{tpu_custom_call.1} parent=0 // pred_region
    _
  $region21: #{tpu_custom_call.1} parent=0 // pred_fallthru
    _
  // Predicated region
  $region22: #{tpu_custom_call.1} parent=0 // pred_check
    _
  $region23: #{tpu_custom_call.1} parent=0 // pred_check_branch
    %23 = sbr.rel (0) target = $region25
  $region24: #{tpu_custom_call.1} parent=0 // pred_region
    _
  $region25: #{tpu_custom_call.1} parent=0 // pred_fallthru
    _
  // Predicated region
  $region26: #{tpu_custom_call.1} parent=0 // pred_check
    _
  $region27: #{tpu_custom_call.1} parent=0 // pred_check_branch
    %25 = sbr.rel (0) target = $region29
  $region28: #{tpu_custom_call.1} parent=0 // pred_region
    _
  $region29: #{tpu_custom_call.1} parent=0 // pred_fallthru
    _
  %v26 = vld [vmem:[%s0] sm:$0xff]
  %v27 = vld [vmem:[%s1] sm:$0xff]
  %v28 = vld [vmem:[%s1 + $0x8] sm:$0xff]
  %v29 = vld [vmem:[%s2] sm:$0x1]
  %v31 = vlaneseq
  %v32 = vshrl.u32 %v31, 7
  %v33 = vsub.s32 0, %v32
  %v34 = vrot.slane %v29, %v33
  %vm36 = vcmask 130048
  %v38 = vsel %vm36, %v26, 0
  %40 = vmatprep.subr.mxu0 0.0
  %41 = vmatpush1.msra.mxu0 0.0
  %42 = vmatprep.subr.mxu0 0.0
  %43 = vmatpush1.msra.mxu0 0.0
  %44 = vmatprep.subr.mxu0 0.0
  %45 = vmatpush1.msra.mxu0 0.0
  %46 = vmatprep.subr.mxu0 0.0
  %47 = vmatpush1.msra.mxu0 0.0
  %48 = vmatprep.subr.mxu0 0.0
  %49 = vmatpush1.msra.mxu0 0.0
  %50 = vmatprep.subr.mxu0 0.0
  %51 = vmatpush1.msra.mxu0 0.0
  %52 = vmatprep.subr.mxu0 0.0
  %53 = vmatpush1.msra.mxu0 0.0
  %54 = vmatprep.subr.mxu0 0.0
  %55 = vmatpush1.msra.mxu0 0.0
  %56 = vmatprep.subr.mxu0 0.0
  %57 = vmatpush1.msra.mxu0 0.0
  %58 = vmatprep.subr.mxu0 0.0
  %59 = vmatpush1.msra.mxu0 0.0
  %60 = vmatprep.subr.mxu0 0.0
  %61 = vmatpush1.msra.mxu0 0.0
  %62 = vmatprep.subr.mxu0 0.0
  %63 = vmatpush1.msra.mxu0 0.0
  %64 = vmatprep.subr.mxu0 0.0
  %65 = vmatpush1.msra.mxu0 0.0
  %66 = vmatprep.subr.mxu0 0.0
  %67 = vmatpush1.msra.mxu0 0.0
  %68 = vmatprep.subr.mxu0 0.0
  %69 = vmatpush1.msra.mxu0 %v28
  %70 = vmatprep.subr.mxu0 0.0
  %71 = vmatpush1.msra.mxu0 %v27
  %72 = vmatprep.subr.mxu0 0.0
  %73 = vmatpush2.msra.mxu0 0.0
  %74 = vmatprep.subr.mxu0 0.0
  %75 = vmatpush2.msra.mxu0 0.0
  %76 = vmatprep.subr.mxu0 0.0
  %77 = vmatpush2.msra.mxu0 0.0
  %78 = vmatprep.subr.mxu0 0.0
  %79 = vmatpush2.msra.mxu0 0.0
  %80 = vmatprep.subr.mxu0 0.0
  %81 = vmatpush2.msra.mxu0 0.0
  %82 = vmatprep.subr.mxu0 0.0
  %83 = vmatpush2.msra.mxu0 0.0
  %84 = vmatprep.subr.mxu0 0.0
  %85 = vmatpush2.msra.mxu0 0.0
  %86 = vmatprep.subr.mxu0 0.0
  %87 = vmatpush2.msra.mxu0 0.0
  %88 = vmatprep.subr.mxu0 0.0
  %89 = vmatpush2.msra.mxu0 0.0
  %90 = vmatprep.subr.mxu0 0.0
  %91 = vmatpush2.msra.mxu0 0.0
  %92 = vmatprep.subr.mxu0 0.0
  %93 = vmatpush2.msra.mxu0 0.0
  %94 = vmatprep.subr.mxu0 0.0
  %95 = vmatpush2.msra.mxu0 0.0
  %96 = vmatprep.subr.mxu0 0.0
  %97 = vmatpush2.msra.mxu0 0.0
  %98 = vmatprep.subr.mxu0 0.0
  %99 = vmatpush2.msra.mxu0 0.0
  %100 = vmatprep.subr.mxu0 0.0
  %101 = vmatpush2.msra.mxu0 0.0
  %102 = vmatprep.subr.mxu0 0.0
  %103 = vmatpush2.msra.mxu0 0.0
  %104 = vmatprep.mubr.f32.mxu0 0.0
  %105 = vmatmul.mubr.f32.gmra.mxu0 %v38
  %v106 = vpop.f32.mrf.mxu0
  %v107 = vadd.f32 %v34, %v106
  %v108 = vpop.f32.mrf.mxu0
  %109 = vdwg.mxu0
  %v110 = vmax.f32 %v107, 0.0
  %v111 = vld [vmem:[%s3] sm:$0xff]
  %v112 = vld [vmem:[%s3 + $0x8] sm:$0xff]
  %v113 = vld [vmem:[%s3 + $0x10] sm:$0xff]
  %v114 = vld [vmem:[%s3 + $0x18] sm:$0xff]
  %v115 = vld [vmem:[%s3 + $0x20] sm:$0xff]
  %v116 = vld [vmem:[%s3 + $0x28] sm:$0xff]
  %v117 = vld [vmem:[%s3 + $0x30] sm:$0xff]
  %v118 = vld [vmem:[%s3 + $0x38] sm:$0xff]
  %v119 = vld [vmem:[%s4] sm:$0x1]
  %v121 = vlaneseq
  %v122 = vshrl.u32 %v121, 7
  %v123 = vsub.s32 0, %v122
  %v124 = vrot.slane %v119, %v123
  %vm126 = vcmask 523264
  %v128 = vsel %vm126, %v110, 0
  %130 = vmatprep.subr.mxu0 0.0
  %131 = vmatpush1.msra.mxu0 0.0
  %132 = vmatprep.subr.mxu0 0.0
  %133 = vmatpush1.msra.mxu0 0.0
  %134 = vmatprep.subr.mxu0 0.0
  %135 = vmatpush1.msra.mxu0 0.0
  %136 = vmatprep.subr.mxu0 0.0
  %137 = vmatpush1.msra.mxu0 0.0
  %138 = vmatprep.subr.mxu0 0.0
  %139 = vmatpush1.msra.mxu0 0.0
  %140 = vmatprep.subr.mxu0 0.0
  %141 = vmatpush1.msra.mxu0 0.0
  %142 = vmatprep.subr.mxu0 0.0
  %143 = vmatpush1.msra.mxu0 0.0
  %144 = vmatprep.subr.mxu0 0.0
  %145 = vmatpush1.msra.mxu0 0.0
  %146 = vmatprep.subr.mxu0 0.0
  %147 = vmatpush1.msra.mxu0 %v118
  %148 = vmatprep.subr.mxu0 0.0
  %149 = vmatpush1.msra.mxu0 %v117
  %150 = vmatprep.subr.mxu0 0.0
  %151 = vmatpush1.msra.mxu0 %v116
  %152 = vmatprep.subr.mxu0 0.0
  %153 = vmatpush1.msra.mxu0 %v115
  %154 = vmatprep.subr.mxu0 0.0
  %155 = vmatpush1.msra.mxu0 %v114
  %156 = vmatprep.subr.mxu0 0.0
  %157 = vmatpush1.msra.mxu0 %v113
  %158 = vmatprep.subr.mxu0 0.0
  %159 = vmatpush1.msra.mxu0 %v112
  %160 = vmatprep.subr.mxu0 0.0
  %161 = vmatpush1.msra.mxu0 %v111
  %162 = vmatprep.subr.mxu0 0.0
  %163 = vmatpush2.msra.mxu0 0.0
  %164 = vmatprep.subr.mxu0 0.0
  %165 = vmatpush2.msra.mxu0 0.0
  %166 = vmatprep.subr.mxu0 0.0
  %167 = vmatpush2.msra.mxu0 0.0
  %168 = vmatprep.subr.mxu0 0.0
  %169 = vmatpush2.msra.mxu0 0.0
  %170 = vmatprep.subr.mxu0 0.0
  %171 = vmatpush2.msra.mxu0 0.0
  %172 = vmatprep.subr.mxu0 0.0
  %173 = vmatpush2.msra.mxu0 0.0
  %174 = vmatprep.subr.mxu0 0.0
  %175 = vmatpush2.msra.mxu0 0.0
  %176 = vmatprep.subr.mxu0 0.0
  %177 = vmatpush2.msra.mxu0 0.0
  %178 = vmatprep.subr.mxu0 0.0
  %179 = vmatpush2.msra.mxu0 0.0
  %180 = vmatprep.subr.mxu0 0.0
  %181 = vmatpush2.msra.mxu0 0.0
  %182 = vmatprep.subr.mxu0 0.0
  %183 = vmatpush2.msra.mxu0 0.0
  %184 = vmatprep.subr.mxu0 0.0
  %185 = vmatpush2.msra.mxu0 0.0
  %186 = vmatprep.subr.mxu0 0.0
  %187 = vmatpush2.msra.mxu0 0.0
  %188 = vmatprep.subr.mxu0 0.0
  %189 = vmatpush2.msra.mxu0 0.0
  %190 = vmatprep.subr.mxu0 0.0
  %191 = vmatpush2.msra.mxu0 0.0
  %192 = vmatprep.subr.mxu0 0.0
  %193 = vmatpush2.msra.mxu0 0.0
  %194 = vmatprep.mubr.f32.mxu0 0.0
  %195 = vmatmul.mubr.f32.gmra.mxu0 %v128
  %v196 = vpop.f32.mrf.mxu0
  %v197 = vadd.f32 %v124, %v196
  %v198 = vpop.f32.mrf.mxu0
  %199 = vdwg.mxu0
  %v200 = vmax.f32 %v197, 0.0
  %v201 = vld [vmem:[%s5] sm:$0xff]
  %v202 = vld [vmem:[%s5 + $0x8] sm:$0xff]
  %v203 = vld [vmem:[%s5 + $0x10] sm:$0xff]
  %v204 = vld [vmem:[%s5 + $0x18] sm:$0xff]
  %v205 = vld [vmem:[%s5 + $0x20] sm:$0xff]
  %v206 = vld [vmem:[%s5 + $0x28] sm:$0xff]
  %v207 = vld [vmem:[%s5 + $0x30] sm:$0xff]
  %v208 = vld [vmem:[%s5 + $0x38] sm:$0xff]
  %v209 = vld [vmem:[%s5 + $0x40] sm:$0xff]
  %v210 = vld [vmem:[%s5 + $0x48] sm:$0xff]
  %v211 = vld [vmem:[%s5 + $0x50] sm:$0xff]
  %v212 = vld [vmem:[%s5 + $0x58] sm:$0xff]
  %v213 = vld [vmem:[%s5 + $0x60] sm:$0xff]
  %v214 = vld [vmem:[%s5 + $0x68] sm:$0xff]
  %v215 = vld [vmem:[%s5 + $0x70] sm:$0xff]
  %v216 = vld [vmem:[%s5 + $0x78] sm:$0xff]
  %v217 = vld [vmem:[%s6] sm:$0x1]
  %v219 = vlaneseq
  %v220 = vshrl.u32 %v219, 7
  %v221 = vsub.s32 0, %v220
  %v222 = vrot.slane %v217, %v221
  %224 = vmatprep.subr.mxu0 0.0
  %225 = vmatpush1.msra.mxu0 %v216
  %226 = vmatprep.subr.mxu0 0.0
  %227 = vmatpush1.msra.mxu0 %v215
  %228 = vmatprep.subr.mxu0 0.0
  %229 = vmatpush1.msra.mxu0 %v214
  %230 = vmatprep.subr.mxu0 0.0
  %231 = vmatpush1.msra.mxu0 %v213
  %232 = vmatprep.subr.mxu0 0.0
  %233 = vmatpush1.msra.mxu0 %v212
  %234 = vmatprep.subr.mxu0 0.0
  %235 = vmatpush1.msra.mxu0 %v211
  %236 = vmatprep.subr.mxu0 0.0
  %237 = vmatpush1.msra.mxu0 %v210
  %238 = vmatprep.subr.mxu0 0.0
  %239 = vmatpush1.msra.mxu0 %v209
  %240 = vmatprep.subr.mxu0 0.0
  %241 = vmatpush1.msra.mxu0 %v208
  %242 = vmatprep.subr.mxu0 0.0
  %243 = vmatpush1.msra.mxu0 %v207
  %244 = vmatprep.subr.mxu0 0.0
  %245 = vmatpush1.msra.mxu0 %v206
  %246 = vmatprep.subr.mxu0 0.0
  %247 = vmatpush1.msra.mxu0 %v205
  %248 = vmatprep.subr.mxu0 0.0
  %249 = vmatpush1.msra.mxu0 %v204
  %250 = vmatprep.subr.mxu0 0.0
  %251 = vmatpush1.msra.mxu0 %v203
  %252 = vmatprep.subr.mxu0 0.0
  %253 = vmatpush1.msra.mxu0 %v202
  %254 = vmatprep.subr.mxu0 0.0
  %255 = vmatpush1.msra.mxu0 %v201
  %256 = vmatprep.subr.mxu0 0.0
  %257 = vmatpush2.msra.mxu0 0.0
  %258 = vmatprep.subr.mxu0 0.0
  %259 = vmatpush2.msra.mxu0 0.0
  %260 = vmatprep.subr.mxu0 0.0
  %261 = vmatpush2.msra.mxu0 0.0
  %262 = vmatprep.subr.mxu0 0.0
  %263 = vmatpush2.msra.mxu0 0.0
  %264 = vmatprep.subr.mxu0 0.0
  %265 = vmatpush2.msra.mxu0 0.0
  %266 = vmatprep.subr.mxu0 0.0
  %267 = vmatpush2.msra.mxu0 0.0
  %268 = vmatprep.subr.mxu0 0.0
  %269 = vmatpush2.msra.mxu0 0.0
  %270 = vmatprep.subr.mxu0 0.0
  %271 = vmatpush2.msra.mxu0 0.0
  %272 = vmatprep.subr.mxu0 0.0
  %273 = vmatpush2.msra.mxu0 0.0
  %274 = vmatprep.subr.mxu0 0.0
  %275 = vmatpush2.msra.mxu0 0.0
  %276 = vmatprep.subr.mxu0 0.0
  %277 = vmatpush2.msra.mxu0 0.0
  %278 = vmatprep.subr.mxu0 0.0
  %279 = vmatpush2.msra.mxu0 0.0
  %280 = vmatprep.subr.mxu0 0.0
  %281 = vmatpush2.msra.mxu0 0.0
  %282 = vmatprep.subr.mxu0 0.0
  %283 = vmatpush2.msra.mxu0 0.0
  %284 = vmatprep.subr.mxu0 0.0
  %285 = vmatpush2.msra.mxu0 0.0
  %286 = vmatprep.subr.mxu0 0.0
  %287 = vmatpush2.msra.mxu0 0.0
  %288 = vmatprep.mubr.f32.mxu0 0.0
  %289 = vmatmul.mubr.f32.gmra.mxu0 %v200
  %v290 = vpop.f32.mrf.mxu0
  %v291 = vadd.f32 %v222, %v290
  %v292 = vpop.f32.mrf.mxu0
  %293 = vdwg.mxu0
  %vm294 = vcmask 31744
  %295 = vst.msk [vmem:[%s7] sm:$0xff] %vm294, %v291
  // Predicated region
  $region30: #{tpu_custom_call.1} parent=0 // pred_check
    _
  $region31: #{tpu_custom_call.1} parent=0 // pred_check_branch
    %297 = sbr.rel (0) target = $region33
  $region32: #{tpu_custom_call.1} parent=0 // pred_region
    _
  $region33: #{tpu_custom_call.1} parent=0 // pred_fallthru
    _
  // Predicated region
  $region34: #{tpu_custom_call.1} parent=0 // pred_check
    _
  $region35: #{tpu_custom_call.1} parent=0 // pred_check_branch
    %299 = sbr.rel (0) target = $region37
  $region36: #{tpu_custom_call.1} parent=0 // pred_region
    _
  $region37: #{tpu_custom_call.1} parent=0 // pred_fallthru
    _

</llo_original>
